<compile_context>
chip_gen: v5e
topology: v5e:2x2
jax: 0.10.0
libtpu: 0.0.40
codegen_flags: <defaults>
</compile_context>

<pallas_src>
import functools

import jax
import jax.numpy as jnp
import numpy as np
from jax import lax
from jax.experimental import pallas as pl
from jax.experimental.pallas import tpu as pltpu


def _round_up(x, m):
    return ((x + m - 1) // m) * m


# --------------------------------------------------------------------------
# Pallas kernel: single fused complex conv-as-GEMM, lane-dense layout.
#   w_ref : (2O, 2K)  fused complex weight  [[Wr, -Wi], [Wi, Wr]]
#   x_ref : (2K, tm)  fused im2col columns  [A_T ; B_T]   (M on the lane axis)
#   b_ref : (2O, 1)   fused bias            [b_re - b_im ; b_re + b_im]  (f32)
#   o_ref : (2O, tm)  [real ; imag] output rows, lane-dense stores
# --------------------------------------------------------------------------
def _complex_conv_gemm_kernel(w_ref, x_ref, b_ref, o_ref):
    acc = jnp.dot(w_ref[...], x_ref[...], preferred_element_type=jnp.float32)
    o_ref[...] = acc + b_ref[...]


def _im2col_nchw_T(x, kh, kw, pad):
    """x: (B, C, H, W) -> (C*kh*kw, B*H*W).

    K axis ordering matches the OIHW weight flattening (c, i, j); the M axis
    flattens (B, H, W) in that order and becomes the TPU lane axis.
    """
    B, C, H, W = x.shape
    xp = jnp.pad(x, ((0, 0), (0, 0), (pad, pad), (pad, pad)))
    cols = []
    for i in range(kh):
        for j in range(kw):
            cols.append(xp[:, :, i:i + H, j:j + W])        # (B, C, H, W)
    patches = jnp.stack(cols, axis=2)                      # (B, C, kh*kw, H, W)
    patches = patches.transpose(1, 2, 0, 3, 4)             # (C, kh*kw, B, H, W)
    return patches.reshape(C * kh * kw, B * H * W)


def complex_conv2d_pallas(x_re, x_im, w_re, b_re, w_im, b_im, *, padding=1,
                          tm=512, compute_dtype=jnp.float32):
    """ArgsComplexMultiplicationWrapper(Conv2d) forward.

    x_re, x_im : (B, C, H, W) float32   (real / imaginary parts of the input)
    w_re, w_im : (O, C, kH, kW) float32 (weights of re_module / im_module)
    b_re, b_im : (O,) float32
    compute_dtype: MXU input dtype (f32, or bf16 to halve HBM traffic on
                   v6e/v7x; accumulation stays f32 either way).
    returns    : (B, O, H, W) complex64
    """
    B, C, H, W = x_re.shape
    O, _, kh, kw = w_re.shape
    K = C * kh * kw
    M = B * H * W

    # ---- glue (plain JAX): transposed im2col + fused complex weight/bias ----
    A_T = _im2col_nchw_T(x_re, kh, kw, padding)            # (K, M)
    B_T = _im2col_nchw_T(x_im, kh, kw, padding)            # (K, M)
    X_T = jnp.concatenate([A_T, B_T], axis=0)              # (2K, M)

    Wr = w_re.reshape(O, K)
    Wi = w_im.reshape(O, K)
    W_big = jnp.concatenate(
        [jnp.concatenate([Wr, -Wi], axis=1),
         jnp.concatenate([Wi, Wr], axis=1)], axis=0)       # (2O, 2K)

    b_big = jnp.concatenate([b_re - b_im, b_re + b_im]).reshape(2 * O, 1)
    b_big = b_big.astype(jnp.float32)                      # bias add stays f32

    # ---- tile selection: big lane tiles, >= 2 grid steps for v7x dual-TC ----
    tm_eff = min(tm, _round_up(max(pl.cdiv(M, 2), 128), 128))
    M_pad = _round_up(M, tm_eff)
    if M_pad != M:
        X_T = jnp.pad(X_T, ((0, 0), (0, M_pad - M)))
    grid = (M_pad // tm_eff,)

    X_T = X_T.astype(compute_dtype)
    W_big = W_big.astype(compute_dtype)

    out = pl.pallas_call(
        _complex_conv_gemm_kernel,
        out_shape=jax.ShapeDtypeStruct((2 * O, M_pad), jnp.float32),
        grid_spec=pltpu.PrefetchScalarGridSpec(
            num_scalar_prefetch=0,
            grid=grid,
            in_specs=[
                pl.BlockSpec((2 * O, 2 * K), lambda i: (0, 0)),   # W_big (full)
                pl.BlockSpec((2 * K, tm_eff), lambda i: (0, i)),  # X_T tile
                pl.BlockSpec((2 * O, 1), lambda i: (0, 0)),       # fused bias
            ],
            out_specs=pl.BlockSpec((2 * O, tm_eff), lambda i: (0, i)),
        ),
        compiler_params=pltpu.CompilerParams(
            dimension_semantics=("parallel",),
            vmem_limit_bytes=64 << 20,
        ),
    )(W_big, X_T, b_big)

    # ---- back to NCHW and pack as complex (mirrors torch_complex_from_reim) ----
    out = out[:, :M]                                        # drop padded columns
    out_re = out[:O, :].reshape(O, B, H, W).transpose(1, 0, 2, 3)
    out_im = out[O:, :].reshape(O, B, H, W).transpose(1, 0, 2, 3)
    return lax.complex(out_re, out_im)


# --------------------------------------------------------------------------
# Pure-JAX reference (lax conv) for correctness check.
# --------------------------------------------------------------------------
def _ref_conv(x, w, b, padding):
    y = lax.conv_general_dilated(
        x, w, window_strides=(1, 1),
        padding=[(padding, padding), (padding, padding)],
        dimension_numbers=("NCHW", "OIHW", "NCHW"))
    return y + b.reshape(1, -1, 1, 1)


def _ref_complex_conv(x_re, x_im, w_re, b_re, w_im, b_im, padding):
    re = _ref_conv(x_re, w_re, b_re, padding) - _ref_conv(x_im, w_im, b_im, padding)
    im = _ref_conv(x_im, w_re, b_re, padding) + _ref_conv(x_re, w_im, b_im, padding)
    return lax.complex(re, im)


if __name__ == "__main__":
    Bsz, Cin, Hh, Ww = 2, 4, 16, 16
    Cout, kh, kw, pad = 8, 3, 3, 1

    key = jax.random.PRNGKey(0)
    k_xr, k_xi, k_wr, k_br, k_wi, k_bi = jax.random.split(key, 6)

    x_re = jax.random.normal(k_xr, (Bsz, Cin, Hh, Ww), dtype=jnp.float32)
    x_im = jax.random.normal(k_xi, (Bsz, Cin, Hh, Ww), dtype=jnp.float32)

    fan_in = Cin * kh * kw
    scale = 1.0 / np.sqrt(fan_in)
    w_re = scale * jax.random.normal(k_wr, (Cout, Cin, kh, kw), dtype=jnp.float32)
    b_re = scale * jax.random.normal(k_br, (Cout,), dtype=jnp.float32)
    w_im = scale * jax.random.normal(k_wi, (Cout, Cin, kh, kw), dtype=jnp.float32)
    b_im = scale * jax.random.normal(k_bi, (Cout,), dtype=jnp.float32)

    # ---- f32 path: bit-accurate vs. the reference (tight tolerance) ----
    fwd = jax.jit(functools.partial(complex_conv2d_pallas, padding=pad))
    out = jax.block_until_ready(fwd(x_re, x_im, w_re, b_re, w_im, b_im))
    ref = _ref_complex_conv(x_re, x_im, w_re, b_re, w_im, b_im, pad)
    assert out.shape == (Bsz, Cout, Hh, Ww) and out.dtype == jnp.complex64
    np.testing.assert_allclose(np.asarray(out), np.asarray(ref),
                               rtol=1e-4, atol=1e-4)

    # ---- non-divisible M path (B*H*W = 390, exercises cdiv + padded tile) ----
    Hh2, Ww2 = 15, 13
    x_re2 = jax.random.normal(k_xr, (Bsz, Cin, Hh2, Ww2), dtype=jnp.float32)
    x_im2 = jax.random.normal(k_xi, (Bsz, Cin, Hh2, Ww2), dtype=jnp.float32)
    out2 = jax.block_until_ready(
        jax.jit(functools.partial(complex_conv2d_pallas, padding=pad))(
            x_re2, x_im2, w_re, b_re, w_im, b_im))
    ref2 = _ref_complex_conv(x_re2, x_im2, w_re, b_re, w_im, b_im, pad)
    np.testing.assert_allclose(np.asarray(out2), np.asarray(ref2),
                               rtol=1e-4, atol=1e-4)

    # ---- bf16 MXU-input path (HBM-byte saver on v6e/v7x), loose tolerance ----
    fwd_bf16 = jax.jit(functools.partial(complex_conv2d_pallas, padding=pad,
                                         compute_dtype=jnp.bfloat16))
    out_bf16 = jax.block_until_ready(fwd_bf16(x_re, x_im, w_re, b_re, w_im, b_im))
    np.testing.assert_allclose(np.asarray(out_bf16), np.asarray(ref),
                               rtol=2e-1, atol=2e-1)

    print("KERNEL_OK")
</pallas_src>

<mosaic_0001>
module attributes {stable_mosaic.version = 11 : i64} {
  func.func @_complex_conv_gemm_kernel(%arg0: i32, %arg1: memref<16x72xf32, #tpu.memory_space<vmem>>, %arg2: memref<72x256xf32, #tpu.memory_space<vmem>>, %arg3: memref<16x1xf32, #tpu.memory_space<vmem>>, %arg4: memref<16x256xf32, #tpu.memory_space<vmem>>) attributes {dimension_semantics = [#tpu.dimension_semantics<parallel>], iteration_bounds = array<i64: 2>, scalar_prefetch = 0 : i64, scratch_operands = 0 : i64, tpu.core_type = #tpu.core_type<tc>, window_params = [{pipeline_mode = #tpu.pipeline_mode<synchronous>, transform_indices = @transform_0, window_bounds = array<i64: 16, 72>}, {transform_indices = @transform_1, window_bounds = array<i64: 72, 256>}, {pipeline_mode = #tpu.pipeline_mode<synchronous>, transform_indices = @transform_2, window_bounds = array<i64: 16, 1>}, {transform_indices = @transform_3, window_bounds = array<i64: 16, 256>}]} {
    %c0 = arith.constant 0 : index
    %c0_0 = arith.constant 0 : index
    %0 = vector.load %arg1[%c0, %c0_0] : memref<16x72xf32, #tpu.memory_space<vmem>>, vector<16x72xf32>
    %c0_1 = arith.constant 0 : index
    %c0_2 = arith.constant 0 : index
    %1 = vector.load %arg2[%c0_1, %c0_2] : memref<72x256xf32, #tpu.memory_space<vmem>>, vector<72x256xf32>
    %cst = arith.constant dense<0.000000e+00> : vector<16x256xf32>
    %2 = tpu.matmul %0, %1, %cst {dimension_numbers = #tpu.dot_dimension_numbers<[1], [0], [0], [1], [0, 0, 1, 1], [], []>} : vector<16x72xf32>, vector<72x256xf32>, vector<16x256xf32> -> vector<16x256xf32>
    %c0_3 = arith.constant 0 : index
    %c0_4 = arith.constant 0 : index
    %3 = vector.load %arg3[%c0_3, %c0_4] : memref<16x1xf32, #tpu.memory_space<vmem>>, vector<16x1xf32>
    %4 = vector.broadcast %3 : vector<16x1xf32> to vector<16x256xf32>
    %5 = arith.addf %2, %4 : vector<16x256xf32>
    %c0_5 = arith.constant 0 : index
    %c0_6 = arith.constant 0 : index
    %6 = vector.load %arg4[%c0_5, %c0_6] : memref<16x256xf32, #tpu.memory_space<vmem>>, vector<16x256xf32>
    tpu.vector_store %arg4[%c0_5, %c0_6], %5 {strides = array<i32>} : memref<16x256xf32, #tpu.memory_space<vmem>>, vector<16x256xf32>,
    return
  }
  func.func @transform_0(%arg0: i32) -> (i32, i32) {
    %c0_i32 = arith.constant 0 : i32
    %c0_i32_0 = arith.constant 0 : i32
    %c0_i32_1 = arith.constant 0 : i32
    return %c0_i32, %c0_i32_0 : i32, i32
  }
  func.func @transform_1(%arg0: i32) -> (i32, i32) {
    %c0_i32 = arith.constant 0 : i32
    %c0_i32_0 = arith.constant 0 : i32
    return %c0_i32, %arg0 : i32, i32
  }
  func.func @transform_2(%arg0: i32) -> (i32, i32) {
    %c0_i32 = arith.constant 0 : i32
    %c0_i32_0 = arith.constant 0 : i32
    %c0_i32_1 = arith.constant 0 : i32
    return %c0_i32, %c0_i32_0 : i32, i32
  }
  func.func @transform_3(%arg0: i32) -> (i32, i32) {
    %c0_i32 = arith.constant 0 : i32
    %c0_i32_0 = arith.constant 0 : i32
    return %c0_i32, %arg0 : i32, i32
  }
}

</mosaic_0001>

<llo_original>
// kernel: neg.1
$region0: #{neg.1}
  #allocation0 [shape = 's32[1]{0}', space=sflag, size = 0x4, scoped, tag = 'scoped memory for neg.1']
  %s0 = inlined_call_operand.vmem [shape: f32[8,36], index: 0, kind: input, shape index: {}]
  %s1 = inlined_call_operand.vmem [shape: f32[8,36], index: 1, kind: output, shape index: {}]
  %v2 = vld [vmem:[%s0] sm:$0xff]
  %3 = xla_tuple %v2
  %4 = xla_tuple %3
  %v5 = vxor.u32 %v2, 2147483648
  %6 = xla_tuple %v5
  %7 = vst [vmem:[%s1] sm:$0xff] %v5

// kernel: custom-call
$region0: #{custom-call}
  %s0 = inlined_call_operand.vmem [shape: f32[2,8,16,16], index: 0, kind: input, shape index: {}]
  %s1 = inlined_call_operand.vmem [shape: f32[2,8,16,16], index: 1, kind: input, shape index: {}]
  %s2 = inlined_call_operand.hbm [shape: c64[2,8,16,16], index: 2, kind: output, shape index: {}]
  %s3 = scalar_lea.hbm %s2, 256
  $region1: #{custom-call} parent=0
    #allocation0 [shape = 's32[1]{0}', space=sflag, size = 0x4, scoped, tag = 'scoped memory for custom-call']
    %4 = vsyncpa [#allocation0], 0
    %s6 = sshll.u32 %s0, 4
    %s7 = int_to_ptr.vmem [resolvable:$true] %s6
    %s8 = sshll.u32 %s2, 4
    %s9 = int_to_ptr.hbm [resolvable:$true] %s8
    %11 = dma.vmem_to_hbm [thread:$0]  %s7, 4096, %s9, [#allocation0]
    %13 = dma.done [#allocation0], 4096
    %14 = vsyncpa [#allocation0], 1
  $region2: #{custom-call} parent=0
    #allocation1 [shape = 's32[1]{0}', space=sflag, size = 0x4, scoped, tag = 'scoped memory for custom-call']
    %15 = vsyncpa [#allocation1], 0
    %s17 = sshll.u32 %s1, 4
    %s18 = int_to_ptr.vmem [resolvable:$true] %s17
    %s19 = sshll.u32 %s3, 4
    %s20 = int_to_ptr.hbm [resolvable:$true] %s19
    %22 = dma.vmem_to_hbm [thread:$0]  %s18, 4096, %s20, [#allocation1]
    %24 = dma.done [#allocation1], 4096
    %25 = vsyncpa [#allocation1], 1

// kernel: complex_conv2d_pallas.1
$region0: #{complex_conv2d_pallas.1}
  #allocation0 [shape = 'u32[]', space=smem, size = 0x4, offset = 0x4, fixed_abs, tag = 'smem constant byte address 0x4 - core index']
  #allocation1 [shape = 'u32[72,128]{1,0:T(1,128)}', space=vmem, size = 0x9000, scoped, tag = 'internal scratch']
  %s0 = inlined_call_operand.vmem [shape: f32[16,72], index: 0, kind: input, shape index: {}]
  %s1 = inlined_call_operand.vmem [shape: f32[72,512], index: 1, kind: input, shape index: {}]
  %s2 = inlined_call_operand.vmem [shape: f32[16,1], index: 2, kind: input, shape index: {}]
  %s3 = inlined_call_operand.vmem [shape: f32[16,512], index: 3, kind: output, shape index: {}]
  %s4 = sld [smem:[#allocation0]]
  $region87: #{complex_conv2d_pallas.1} parent=0
    _
  %s6 = ssub.s32 1, %s4
  %s7 = scalar_select 0, %s6, %s4
  $region1: #{complex_conv2d_pallas.1} parent=0
    #allocation2 [shape = 'u8[147456]{0}', space=vmem, size = 0x24000, scoped, tag = 'input window, operand 1']
    #allocation3 [shape = 'u8[32768]{0}', space=vmem, size = 0x8000, scoped, tag = 'output window, operand 0']
    loop: start=0, step=1, limit=4
    $region2: #{complex_conv2d_pallas.1} parent=1 // loop_pre_header
      _
    $region3: #{complex_conv2d_pallas.1} parent=1 // loop_header
      %s9 = sphi 0, %s13
      %p10 = scmp.ge.s32.totalorder %s9, 4
      %s17 = sphi 0, %s17
      %s19 = sphi 0, %s17
      %s20 = sphi 0, %s19
      %s34 = sphi 0, %s20
      %s40 = sphi 0, %s42
      %s43 = sphi 0, %s40
      %s44 = sphi 0, %s43
      %s60 = sphi 0, %s44
      %s64 = sphi 0, %s64
      %s66 = sphi 0, %s64
      %s67 = sphi 0, %s66
      %s81 = sphi 0, %s67
      %s87 = sphi 0, %s89
      %s90 = sphi 0, %s87
      %s91 = sphi 0, %s90
      %s107 = sphi 0, %s91
    $region4: #{complex_conv2d_pallas.1} parent=1 // loop_header_branch
      %12 = sbr.rel (%p10) target = $region8
    $region5: #{complex_conv2d_pallas.1} parent=1 // loop_body
      %s14 = ssub.s32 %s9, 1
      %s15 = ssub.s32 %s9, 2
      %s16 = sadd.s32 %s9, 1
      %s18 = sadd.s32 %s17, 1
      %p21 = scmp.eq.s32.totalorder %s9, 1
      %p22 = scmp.ne.s32.totalorder %s17, %s19
      %p23 = scmp.eq.s32.totalorder %s9, 0
      %p24 = por %p22, %p23
      %p25 = scmp.ne.s32.totalorder %s17, %s19
      %p26 = scmp.eq.s32.totalorder %s14, 1
      %p27 = por %p25, %p26
      %p28 = scmp.ne.s32.totalorder %s19, %s20
      %p29 = scmp.eq.s32.totalorder %s14, 0
      %p30 = por %p28, %p29
      %p31 = scmp.ne.s32.totalorder %s19, %s20
      %p32 = scmp.eq.s32.totalorder %s15, 1
      %p33 = por %p31, %p32
      %p35 = scmp.ne.s32.totalorder %s20, %s34
      %p36 = scmp.eq.s32.totalorder %s15, 0
      %p37 = por %p35, %p36
      %s38 = ssub.s32 %s9, %s16
      %p39 = scmp.eq.s32.totalorder %s38, 0
      %s41 = sadd.s32 %s40, 1
      %s42 = scalar_select %p39, %s40, %s41
      %p45 = pneg %p39
      %p46 = scmp.eq.s32.totalorder %s9, 1
      %p47 = por %p45, %p46
      %p48 = scmp.ne.s32.totalorder %s40, %s43
      %p49 = scmp.eq.s32.totalorder %s9, 0
      %p50 = por %p48, %p49
      %p51 = scmp.ne.s32.totalorder %s40, %s43
      %p52 = scmp.eq.s32.totalorder %s14, 1
      %p53 = por %p51, %p52
      %p54 = scmp.ne.s32.totalorder %s43, %s44
      %p55 = scmp.eq.s32.totalorder %s14, 0
      %p56 = por %p54, %p55
      %p57 = scmp.ne.s32.totalorder %s43, %s44
      %p58 = scmp.eq.s32.totalorder %s15, 1
      %p59 = por %p57, %p58
      %p61 = scmp.ne.s32.totalorder %s44, %s60
      %p62 = scmp.eq.s32.totalorder %s15, 0
      %p63 = por %p61, %p62
      %s65 = sadd.s32 %s64, 1
      %p68 = scmp.eq.s32.totalorder %s9, 1
      %p69 = scmp.ne.s32.totalorder %s64, %s66
      %p70 = scmp.eq.s32.totalorder %s9, 0
      %p71 = por %p69, %p70
      %p72 = scmp.ne.s32.totalorder %s64, %s66
      %p73 = scmp.eq.s32.totalorder %s14, 1
      %p74 = por %p72, %p73
      %p75 = scmp.ne.s32.totalorder %s66, %s67
      %p76 = scmp.eq.s32.totalorder %s14, 0
      %p77 = por %p75, %p76
      %p78 = scmp.ne.s32.totalorder %s66, %s67
      %p79 = scmp.eq.s32.totalorder %s15, 1
      %p80 = por %p78, %p79
      %p82 = scmp.ne.s32.totalorder %s67, %s81
      %p83 = scmp.eq.s32.totalorder %s15, 0
      %p84 = por %p82, %p83
      %s85 = ssub.s32 %s9, %s16
      %p86 = scmp.eq.s32.totalorder %s85, 0
      %s88 = sadd.s32 %s87, 1
      %s89 = scalar_select %p86, %s87, %s88
      %p92 = pneg %p86
      %p93 = scmp.eq.s32.totalorder %s9, 1
      %p94 = por %p92, %p93
      %p95 = scmp.ne.s32.totalorder %s87, %s90
      %p96 = scmp.eq.s32.totalorder %s9, 0
      %p97 = por %p95, %p96
      %p98 = scmp.ne.s32.totalorder %s87, %s90
      %p99 = scmp.eq.s32.totalorder %s14, 1
      %p100 = por %p98, %p99
      %p101 = scmp.ne.s32.totalorder %s90, %s91
      %p102 = scmp.eq.s32.totalorder %s14, 0
      %p103 = por %p101, %p102
      %p104 = scmp.ne.s32.totalorder %s90, %s91
      %p105 = scmp.eq.s32.totalorder %s15, 1
      %p106 = por %p104, %p105
      %p108 = scmp.ne.s32.totalorder %s91, %s107
      %p109 = scmp.eq.s32.totalorder %s15, 0
      %p110 = por %p108, %p109
      %p111 = scmp.le.s32.totalorder 1, %s9
      %p112 = scmp.lt.s32.totalorder %s9, 3
      %p113 = pnand %p111, %p112
      %p114 = pneg %p113
      // Predicated region
      $region9: #{complex_conv2d_pallas.1} parent=5 // pred_check
        _
      $region10: #{complex_conv2d_pallas.1} parent=5 // pred_check_branch
        %116 = sbr.rel (%p113) target = $region12
      $region11: #{complex_conv2d_pallas.1} parent=5 // pred_region
        %s117 = ssub.s32 %s9, 1
        // Predicated region
        $region13: #{complex_conv2d_pallas.1} parent=11 // pred_check
          %p118 = pneg %p30
        $region14: #{complex_conv2d_pallas.1} parent=11 // pred_check_branch
          %120 = sbr.rel (%p118) target = $region16
        $region15: #{complex_conv2d_pallas.1} parent=11 // pred_region
          _
        $region16: #{complex_conv2d_pallas.1} parent=11 // pred_fallthru
          _
        // Predicated region
        $region17: #{complex_conv2d_pallas.1} parent=11 // pred_check
          %p121 = pneg %p77
        $region18: #{complex_conv2d_pallas.1} parent=11 // pred_check_branch
          %123 = sbr.rel (%p121) target = $region20
        $region19: #{complex_conv2d_pallas.1} parent=11 // pred_region
          _
        $region20: #{complex_conv2d_pallas.1} parent=11 // pred_fallthru
          _
      $region12: #{complex_conv2d_pallas.1} parent=5 // pred_fallthru
        _
      %p124 = scmp.lt.s32.totalorder %s9, 2
      // Predicated region
      $region21: #{complex_conv2d_pallas.1} parent=5 // pred_check
        %p125 = pneg %p124
      $region22: #{complex_conv2d_pallas.1} parent=5 // pred_check_branch
        %127 = sbr.rel (%p125) target = $region24
      $region23: #{complex_conv2d_pallas.1} parent=5 // pred_region
        // Predicated region
        $region25: #{complex_conv2d_pallas.1} parent=23 // pred_check
          %p128 = pneg %p50
        $region26: #{complex_conv2d_pallas.1} parent=23 // pred_check_branch
          %130 = sbr.rel (%p128) target = $region28
        $region27: #{complex_conv2d_pallas.1} parent=23 // pred_region
          %s131 = sand.u32 %s40, 1
          %s132 = sand.u32 %s40, 1
          %s133 = smul.addr %s132, 144
          %s134 = scalar_lea.vmem [#allocation2], %s133
          %s135 = smul.u32 2, %s9
          %s136 = smul.addr %s135, 8
          %s137 = scalar_lea.vmem %s1, %s136
          // Predicated region
          $region29: #{complex_conv2d_pallas.1} parent=27 // pred_check
            _
          $region30: #{complex_conv2d_pallas.1} parent=27 // pred_check_branch
            %139 = sbr.rel (0) target = $region32
          $region31: #{complex_conv2d_pallas.1} parent=27 // pred_region
            // Predicated region
            $region33: #{complex_conv2d_pallas.1} parent=31 // pred_check
              _
            $region34: #{complex_conv2d_pallas.1} parent=31 // pred_check_branch
              %141 = sbr.rel (0) target = $region36
            $region35: #{complex_conv2d_pallas.1} parent=31 // pred_region
              loop: start=0, step=1, limit=1
              $region37: #{complex_conv2d_pallas.1} parent=35 // loop_pre_header
                _
              $region38: #{complex_conv2d_pallas.1} parent=35 // loop_header
                %s143 = sphi 0, %s147
                %p144 = scmp.ge.s32.totalorder %s143, 1
                %s148 = sphi %s137, %s137
                %s149 = sphi %s134, %s134
              $region39: #{complex_conv2d_pallas.1} parent=35 // loop_header_branch
                %146 = sbr.rel (%p144) target = $region43
              $region40: #{complex_conv2d_pallas.1} parent=35 // loop_body
                %v150 = vld [vmem:[%s148] sm:$0xff]
                %151 = vst [vmem:[%s149] sm:$0xff] %v150
                %v152 = vld [vmem:[%s148 + $0x8] sm:$0xff]
                %153 = vst [vmem:[%s149 + $0x8] sm:$0xff] %v152
                %v154 = vld [vmem:[%s148 + $0x20] sm:$0xff]
                %155 = vst [vmem:[%s149 + $0x10] sm:$0xff] %v154
                %v156 = vld [vmem:[%s148 + $0x28] sm:$0xff]
                %157 = vst [vmem:[%s149 + $0x18] sm:$0xff] %v156
                %v158 = vld [vmem:[%s148 + $0x40] sm:$0xff]
                %159 = vst [vmem:[%s149 + $0x20] sm:$0xff] %v158
                %v160 = vld [vmem:[%s148 + $0x48] sm:$0xff]
                %161 = vst [vmem:[%s149 + $0x28] sm:$0xff] %v160
                %v162 = vld [vmem:[%s148 + $0x60] sm:$0xff]
                %163 = vst [vmem:[%s149 + $0x30] sm:$0xff] %v162
                %v164 = vld [vmem:[%s148 + $0x68] sm:$0xff]
                %165 = vst [vmem:[%s149 + $0x38] sm:$0xff] %v164
                %v166 = vld [vmem:[%s148 + $0x80] sm:$0xff]
                %167 = vst [vmem:[%s149 + $0x40] sm:$0xff] %v166
                %v168 = vld [vmem:[%s148 + $0x88] sm:$0xff]
                %169 = vst [vmem:[%s149 + $0x48] sm:$0xff] %v168
                %v170 = vld [vmem:[%s148 + $0xa0] sm:$0xff]
                %171 = vst [vmem:[%s149 + $0x50] sm:$0xff] %v170
                %v172 = vld [vmem:[%s148 + $0xa8] sm:$0xff]
                %173 = vst [vmem:[%s149 + $0x58] sm:$0xff] %v172
                %v174 = vld [vmem:[%s148 + $0xc0] sm:$0xff]
                %175 = vst [vmem:[%s149 + $0x60] sm:$0xff] %v174
                %v176 = vld [vmem:[%s148 + $0xc8] sm:$0xff]
                %177 = vst [vmem:[%s149 + $0x68] sm:$0xff] %v176
                %v178 = vld [vmem:[%s148 + $0xe0] sm:$0xff]
                %179 = vst [vmem:[%s149 + $0x70] sm:$0xff] %v178
                %v180 = vld [vmem:[%s148 + $0xe8] sm:$0xff]
                %181 = vst [vmem:[%s149 + $0x78] sm:$0xff] %v180
                %v182 = vld [vmem:[%s148 + $0x100] sm:$0xff]
                %183 = vst [vmem:[%s149 + $0x80] sm:$0xff] %v182
                %v184 = vld [vmem:[%s148 + $0x108] sm:$0xff]
                %185 = vst [vmem:[%s149 + $0x88] sm:$0xff] %v184
              $region41: #{complex_conv2d_pallas.1} parent=35 // loop_footer
                %s147 = sadd.s32 1, %s143
              $region42: #{complex_conv2d_pallas.1} parent=35 // loop_footer_branch
                %142 = sbr.rel target = $region38
              $region43: #{complex_conv2d_pallas.1} parent=35 // loop_exit
                _
            $region36: #{complex_conv2d_pallas.1} parent=31 // pred_fallthru
              _
            // Predicated region
            $region44: #{complex_conv2d_pallas.1} parent=31 // pred_check
              _
            $region45: #{complex_conv2d_pallas.1} parent=31 // pred_check_branch
              %187 = sbr.rel target = $region47
            $region46: #{complex_conv2d_pallas.1} parent=31 // pred_region
              _
            $region47: #{complex_conv2d_pallas.1} parent=31 // pred_fallthru
              _
          $region32: #{complex_conv2d_pallas.1} parent=27 // pred_fallthru
            _
          %188 = vnop
        $region28: #{complex_conv2d_pallas.1} parent=23 // pred_fallthru
          _
      $region24: #{complex_conv2d_pallas.1} parent=5 // pred_fallthru
        _
      %p189 = scmp.le.s32.totalorder 1, %s9
      %p190 = scmp.lt.s32.totalorder %s9, 3
      %p191 = pnand %p189, %p190
      %p192 = pneg %p191
      // Predicated region
      $region48: #{complex_conv2d_pallas.1} parent=5 // pred_check
        _
      $region49: #{complex_conv2d_pallas.1} parent=5 // pred_check_branch
        %194 = sbr.rel (%p191) target = $region51
      $region50: #{complex_conv2d_pallas.1} parent=5 // pred_region
        %s195 = ssub.s32 %s9, 1
        %s196 = sand.u32 %s43, 1
        %s197 = sand.u32 %s43, 1
        %s198 = smul.addr %s197, 144
        %s199 = scalar_lea.vmem [#allocation2], %s198
        // Predicated region
        $region52: #{complex_conv2d_pallas.1} parent=50 // pred_check
          %p200 = pneg %p56
        $region53: #{complex_conv2d_pallas.1} parent=50 // pred_check_branch
          %202 = sbr.rel (%p200) target = $region55
        $region54: #{complex_conv2d_pallas.1} parent=50 // pred_region
          _
        $region55: #{complex_conv2d_pallas.1} parent=50 // pred_fallthru
          _
        %p203 = pneg %p30
        %p204 = pneg %p27
        %s205 = sand.u32 %s43, 1
        %s206 = sand.u32 %s43, 1
        %s207 = smul.addr %s206, 144
        %s208 = scalar_lea.vmem [#allocation2], %s207
        %p209 = pneg %p56
        %p210 = pneg %p53
        %p211 = pneg %p77
        %p212 = pneg %p74
        %p213 = pneg %p103
        %p214 = pneg %p100
        %s215 = sand.u32 %s90, 1
        %s216 = sand.u32 %s90, 1
        %s217 = smul.addr %s216, 32
        %s218 = scalar_lea.vmem [#allocation3], %s217
        %s219 = smul.u32 2, %s14
        %s220 = smul.u32 2, %s14
        %v221 = vld [vmem:[%s0] sm:$0xff]
        %v222 = vld [vmem:[%s0 + $0x8] sm:$0xff]
        %v223 = vld [vmem:[%s199] sm:$0xff]
        %v224 = vld [vmem:[%s199 + $0x8] sm:$0xff]
        %v225 = vld [vmem:[%s199 + $0x10] sm:$0xff]
        %v226 = vld [vmem:[%s199 + $0x18] sm:$0xff]
        %v227 = vld [vmem:[%s199 + $0x20] sm:$0xff]
        %v228 = vld [vmem:[%s199 + $0x28] sm:$0xff]
        %v229 = vld [vmem:[%s199 + $0x30] sm:$0xff]
        %v230 = vld [vmem:[%s199 + $0x38] sm:$0xff]
        %v231 = vld [vmem:[%s199 + $0x40] sm:$0xff]
        %v232 = vld [vmem:[%s199 + $0x48] sm:$0xff]
        %v233 = vld [vmem:[%s199 + $0x50] sm:$0xff]
        %v234 = vld [vmem:[%s199 + $0x58] sm:$0xff]
        %v235 = vld [vmem:[%s199 + $0x60] sm:$0xff]
        %v236 = vld [vmem:[%s199 + $0x68] sm:$0xff]
        %v237 = vld [vmem:[%s199 + $0x70] sm:$0xff]
        %v238 = vld [vmem:[%s199 + $0x78] sm:$0xff]
        %v239 = vld [vmem:[%s199 + $0x80] sm:$0xff]
        %v240 = vld [vmem:[%s199 + $0x88] sm:$0xff]
        %v241 = vld [vmem:[%s2] sm:$0xff]
        %v242 = vld [vmem:[%s2 + $0x8] sm:$0xff]
        %244 = vset.pattern.permute.xlu0 0
        %245 = vperm.xlu0 %244, %v241
        %v246 = vpop.permute.xlu0 %245
        %249 = vset.pattern.permute.xlu0 0
        %250 = vperm.xlu0 %249, %v242
        %v251 = vpop.permute.xlu0 %250
        %vm253 = vcmask 588800
        %v255 = vsel %vm253, %v221, 0
        %v258 = vsel %vm253, %v222, 0
        %260 = vmatpush.msra.mxu0 0.0
        %261 = vmatpush.msra.mxu0 0.0
        %262 = vmatpush.msra.mxu0 0.0
        %263 = vmatpush.msra.mxu0 0.0
        %264 = vmatpush.msra.mxu0 0.0
        %265 = vmatpush.msra.mxu0 0.0
        %266 = vmatpush.msra.mxu0 0.0
        %267 = vmatpush.msra.mxu0 %v239
        %268 = vmatpush.msra.mxu0 %v237
        %269 = vmatpush.msra.mxu0 %v235
        %270 = vmatpush.msra.mxu0 %v233
        %271 = vmatpush.msra.mxu0 %v231
        %272 = vmatpush.msra.mxu0 %v229
        %273 = vmatpush.msra.mxu0 %v227
        %274 = vmatpush.msra.mxu0 %v225
        %275 = vmatpush.msra.mxu0 %v223
        %276 = vmatmul.f32.gmra.mxu0 %v255
        %v277 = vpop.f32.mrf.mxu0
        %v278 = vadd.f32 %v246, %v277
        %279 = vmatmul.f32.gmra.mxu0 %v258
        %v280 = vpop.f32.mrf.mxu0
        %v281 = vadd.f32 %v251, %v280
        %282 = vdwg.mxu0
        %283 = vmatpush.msra.mxu0 0.0
        %284 = vmatpush.msra.mxu0 0.0
        %285 = vmatpush.msra.mxu0 0.0
        %286 = vmatpush.msra.mxu0 0.0
        %287 = vmatpush.msra.mxu0 0.0
        %288 = vmatpush.msra.mxu0 0.0
        %289 = vmatpush.msra.mxu0 0.0
        %290 = vmatpush.msra.mxu0 %v240
        %291 = vmatpush.msra.mxu0 %v238
        %292 = vmatpush.msra.mxu0 %v236
        %293 = vmatpush.msra.mxu0 %v234
        %294 = vmatpush.msra.mxu0 %v232
        %295 = vmatpush.msra.mxu0 %v230
        %296 = vmatpush.msra.mxu0 %v228
        %297 = vmatpush.msra.mxu0 %v226
        %298 = vmatpush.msra.mxu0 %v224
        %299 = vmatmul.f32.gmra.mxu0 %v255
        %v300 = vpop.f32.mrf.mxu0
        %v301 = vadd.f32 %v246, %v300
        %302 = vmatmul.f32.gmra.mxu0 %v258
        %v303 = vpop.f32.mrf.mxu0
        %v304 = vadd.f32 %v251, %v303
        %305 = vdwg.mxu0
        %306 = vst [vmem:[%s218] sm:$0xff] %v278
        %307 = vst [vmem:[%s218 + $0x8] sm:$0xff] %v301
        %308 = vst [vmem:[%s218 + $0x10] sm:$0xff] %v281
        %309 = vst [vmem:[%s218 + $0x18] sm:$0xff] %v304
        %s310 = sand.u32 %s90, 1
        %s311 = sand.u32 %s90, 1
        %s312 = smul.addr %s311, 32
        %s313 = scalar_lea.vmem [#allocation3], %s312
        // Predicated region
        $region56: #{complex_conv2d_pallas.1} parent=50 // pred_check
          %p314 = pneg %p100
        $region57: #{complex_conv2d_pallas.1} parent=50 // pred_check_branch
          %316 = sbr.rel (%p314) target = $region59
        $region58: #{complex_conv2d_pallas.1} parent=50 // pred_region
          %s317 = smul.u32 2, %s14
          %s318 = smul.addr %s317, 8
          %s319 = scalar_lea.vmem %s3, %s318
          // Predicated region
          $region60: #{complex_conv2d_pallas.1} parent=58 // pred_check
            _
          $region61: #{complex_conv2d_pallas.1} parent=58 // pred_check_branch
            %321 = sbr.rel (0) target = $region63
          $region62: #{complex_conv2d_pallas.1} parent=58 // pred_region
            // Predicated region
            $region64: #{complex_conv2d_pallas.1} parent=62 // pred_check
              _
            $region65: #{complex_conv2d_pallas.1} parent=62 // pred_check_branch
              %323 = sbr.rel (0) target = $region67
            $region66: #{complex_conv2d_pallas.1} parent=62 // pred_region
              loop: start=0, step=1, limit=1
              $region68: #{complex_conv2d_pallas.1} parent=66 // loop_pre_header
                _
              $region69: #{complex_conv2d_pallas.1} parent=66 // loop_header
                %s325 = sphi 0, %s329
                %p326 = scmp.ge.s32.totalorder %s325, 1
                %s330 = sphi %s313, %s313
                %s331 = sphi %s319, %s319
              $region70: #{complex_conv2d_pallas.1} parent=66 // loop_header_branch
                %328 = sbr.rel (%p326) target = $region74
              $region71: #{complex_conv2d_pallas.1} parent=66 // loop_body
                %v332 = vld [vmem:[%s330] sm:$0xff]
                %333 = vst [vmem:[%s331] sm:$0xff] %v332
                %v334 = vld [vmem:[%s330 + $0x8] sm:$0xff]
                %335 = vst [vmem:[%s331 + $0x8] sm:$0xff] %v334
                %v336 = vld [vmem:[%s330 + $0x10] sm:$0xff]
                %337 = vst [vmem:[%s331 + $0x20] sm:$0xff] %v336
                %v338 = vld [vmem:[%s330 + $0x18] sm:$0xff]
                %339 = vst [vmem:[%s331 + $0x28] sm:$0xff] %v338
              $region72: #{complex_conv2d_pallas.1} parent=66 // loop_footer
                %s329 = sadd.s32 1, %s325
              $region73: #{complex_conv2d_pallas.1} parent=66 // loop_footer_branch
                %324 = sbr.rel target = $region69
              $region74: #{complex_conv2d_pallas.1} parent=66 // loop_exit
                _
            $region67: #{complex_conv2d_pallas.1} parent=62 // pred_fallthru
              _
            // Predicated region
            $region75: #{complex_conv2d_pallas.1} parent=62 // pred_check
              _
            $region76: #{complex_conv2d_pallas.1} parent=62 // pred_check_branch
              %341 = sbr.rel target = $region78
            $region77: #{complex_conv2d_pallas.1} parent=62 // pred_region
              _
            $region78: #{complex_conv2d_pallas.1} parent=62 // pred_fallthru
              _
          $region63: #{complex_conv2d_pallas.1} parent=58 // pred_fallthru
            _
          %342 = vnop
        $region59: #{complex_conv2d_pallas.1} parent=50 // pred_fallthru
          _
      $region51: #{complex_conv2d_pallas.1} parent=5 // pred_fallthru
        _
      %p343 = scmp.le.s32.totalorder 2, %s9
      // Predicated region
      $region79: #{complex_conv2d_pallas.1} parent=5 // pred_check
        %p344 = pneg %p343
      $region80: #{complex_conv2d_pallas.1} parent=5 // pred_check_branch
        %346 = sbr.rel (%p344) target = $region82
      $region81: #{complex_conv2d_pallas.1} parent=5 // pred_region
        %s347 = ssub.s32 %s9, 2
        // Predicated region
        $region83: #{complex_conv2d_pallas.1} parent=81 // pred_check
          %p348 = pneg %p106
        $region84: #{complex_conv2d_pallas.1} parent=81 // pred_check_branch
          %350 = sbr.rel (%p348) target = $region86
        $region85: #{complex_conv2d_pallas.1} parent=81 // pred_region
          %s351 = sand.u32 %s91, 1
          %s352 = sand.u32 %s91, 1
          %s353 = smul.addr %s352, 32
          %s354 = scalar_lea.vmem [#allocation3], %s353
        $region86: #{complex_conv2d_pallas.1} parent=81 // pred_fallthru
          _
      $region82: #{complex_conv2d_pallas.1} parent=5 // pred_fallthru
        _
    $region6: #{complex_conv2d_pallas.1} parent=1 // loop_footer
      %s13 = sadd.s32 1, %s9
    $region7: #{complex_conv2d_pallas.1} parent=1 // loop_footer_branch
      %8 = sbr.rel target = $region3
    $region8: #{complex_conv2d_pallas.1} parent=1 // loop_exit
      _

</llo_original>
